<compile_context>
chip_gen: v6e
topology: v6e:2x2x1
jax: 0.10.0
libtpu: 0.0.40
codegen_flags: <defaults>
</compile_context>

<pallas_src>
import functools

import jax
import jax.numpy as jnp
from jax import lax
from jax.experimental import pallas as pl
from jax.experimental.pallas import tpu as pltpu

LN_EPS = 1e-5
KNN_K = 3                      # pointops.interpolation default
BIG_DIST = 1e10                # "infinite" distance for cross-batch pairs
BIG_D2 = BIG_DIST * BIG_DIST   # the same threshold in squared-distance space
IDX_SENTINEL = 2 ** 30
VMEM_LIMIT = 32 * 1024 * 1024  # explicit cap; safe on v5e/v6e/v7x (64 MiB/TC)


def _round_up(x, m):
    return ((x + m - 1) // m) * m


def _layernorm_linear(x, g, b, w, bias):
    """LN over last dim (two-pass, biased var like torch) + x @ w + bias."""
    x = x.astype(jnp.float32)
    c = x.shape[-1]
    mean = jnp.sum(x, axis=-1, keepdims=True) * (1.0 / c)
    xc = x - mean
    var = jnp.sum(xc * xc, axis=-1, keepdims=True) * (1.0 / c)
    xn = xc * lax.rsqrt(var + LN_EPS)
    y = xn * g + b
    return jnp.dot(y, w, preferred_element_type=jnp.float32) + bias


# ---------------------------------------------------------------------------
# Kernel 1: fused LayerNorm + Linear (self.linear2), transposed [C_out, M] out
# ---------------------------------------------------------------------------
def _ln_linear_t_kernel(x_ref, g_ref, b_ref, w_ref, bias_ref, o_ref):
    out = _layernorm_linear(x_ref[...], g_ref[...], b_ref[...],
                            w_ref[...], bias_ref[...])          # [rows, C_out]
    o_ref[...] = out.T.astype(o_ref.dtype)                      # [C_out, rows]


def ln_linear_t(x, gamma, beta, w, bias, *, tile_rows=1024,
                out_dtype=jnp.float32):
    m, c_in = x.shape
    c_out = w.shape[1]
    tile_rows = min(tile_rows, _round_up(m, 128))
    return pl.pallas_call(
        _ln_linear_t_kernel,
        out_shape=jax.ShapeDtypeStruct((c_out, m), out_dtype),
        grid=(pl.cdiv(m, tile_rows),),
        in_specs=[
            pl.BlockSpec((tile_rows, c_in), lambda i: (i, 0)),
            pl.BlockSpec((1, c_in), lambda i: (0, 0)),
            pl.BlockSpec((1, c_in), lambda i: (0, 0)),
            pl.BlockSpec((c_in, c_out), lambda i: (0, 0)),
            pl.BlockSpec((1, c_out), lambda i: (0, 0)),
        ],
        out_specs=pl.BlockSpec((c_out, tile_rows), lambda i: (0, i)),
        compiler_params=pltpu.CompilerParams(
            dimension_semantics=("parallel",),
            vmem_limit_bytes=VMEM_LIMIT),
    )(x, gamma.reshape(1, -1), beta.reshape(1, -1), w, bias.reshape(1, -1))


# ---------------------------------------------------------------------------
# Kernel 2: streaming batch-aware 3-NN search, lane-dense [K, TQ] state
# ---------------------------------------------------------------------------
def _knn_top3_kernel(qxyz_t_ref, qb_ref, sxyz_ref, sb_ref,
                     w_out_ref, idx_out_ref, bd_ref, bi_ref,
                     *, tile_m, m_total):
    mi = pl.program_id(1)
    last_m = pl.num_programs(1) - 1

    @pl.when(mi == 0)
    def _():
        bd_ref[...] = jnp.full(bd_ref.shape, jnp.inf, jnp.float32)
        bi_ref[...] = jnp.full(bi_ref.shape, IDX_SENTINEL, jnp.int32)

    q_t = qxyz_t_ref[...].astype(jnp.float32)      # [3, TQ]  query coords (T)
    s = sxyz_ref[...].astype(jnp.float32)          # [TM, 3]  source coords
    qb = qb_ref[...]                               # [1, TQ]  query batch ids
    sb = sb_ref[...]                               # [TM, 1]  source batch ids
    tm = s.shape[0]

    # squared distances via ||s||^2 + ||q||^2 - 2 s.q (MXU for the cross
    # term), already transposed so the query axis sits on the 128 lanes;
    # selection happens on d^2, sqrt only touches the 3 survivors.
    # NOTE: this form can cancel for large-magnitude coordinates; acceptable
    # for normalized point clouds.
    qn = jnp.sum(q_t * q_t, axis=0, keepdims=True)                  # [1, TQ]
    sn = jnp.sum(s * s, axis=1, keepdims=True)                      # [TM, 1]
    cross = jnp.dot(s, q_t, preferred_element_type=jnp.float32)     # [TM, TQ]
    d2 = jnp.maximum(sn + qn - 2.0 * cross, 0.0)

    riota = lax.broadcasted_iota(jnp.int32, (tm, 1), 0) + mi * tile_m
    in_bounds = riota < m_total
    same_batch = (sb == qb) & in_bounds
    # cross-batch pairs get the reference's "infinite" distance (squared);
    # out-of-bounds padding rows are pushed beyond even that.
    d2 = jnp.where(same_batch, d2, jnp.where(in_bounds, BIG_D2, jnp.inf))

    bd = bd_ref[...]                               # [K, TQ]
    bi = bi_ref[...]                               # [K, TQ]
    b0d, b1d, b2d = bd[0:1, :], bd[1:2, :], bd[2:3, :]
    b0i, b1i, b2i = bi[0:1, :], bi[1:2, :], bi[2:3, :]

    # extract this tile's 3 best candidates (as lane-dense [1, TQ] rows via a
    # cheap cross-sublane reduce) and merge them into the running sorted
    # top-3; strict '<' keeps the earlier (lower global index) entry on exact
    # ties, matching a stable argsort.
    for _ in range(KNN_K):
        cmin = jnp.min(d2, axis=0, keepdims=True)                    # [1, TQ]
        cidx = jnp.min(jnp.where(d2 == cmin, riota, IDX_SENTINEL),
                       axis=0, keepdims=True)                        # [1, TQ]
        d2 = jnp.where(riota == cidx, jnp.inf, d2)

        lt0 = cmin < b0d
        lt1 = cmin < b1d
        lt2 = cmin < b2d
        b0d, b1d, b2d, b0i, b1i, b2i = (
            jnp.where(lt0, cmin, b0d),
            jnp.where(lt0, b0d, jnp.where(lt1, cmin, b1d)),
            jnp.where(lt1, b1d, jnp.where(lt2, cmin, b2d)),
            jnp.where(lt0, cidx, b0i),
            jnp.where(lt0, b0i, jnp.where(lt1, cidx, b1i)),
            jnp.where(lt1, b1i, jnp.where(lt2, cidx, b2i)),
        )

    bd = jnp.concatenate([b0d, b1d, b2d], axis=0)
    bi = jnp.concatenate([b0i, b1i, b2i], axis=0)
    bd_ref[...] = bd
    bi_ref[...] = bi

    @pl.when(mi == last_m)
    def _():
        # inverse-distance weights on the 3 selected neighbours only
        # (masked/degenerate slots reproduce the reference's 1e10 distance).
        d = jnp.where(bd >= 0.5 * BIG_D2, BIG_DIST, jnp.sqrt(bd))
        w = 1.0 / (d + 1e-8)
        w_out_ref[...] = w / jnp.sum(w, axis=0, keepdims=True)
        idx_out_ref[...] = bi


def knn_top3(qxyz, qbatch, sxyz, sbatch, *, tile_q=1024, tile_m=512):
    n = qxyz.shape[0]
    m = sxyz.shape[0]
    tile_q = min(tile_q, _round_up(n, 128))
    tile_m = min(tile_m, _round_up(m, 128))
    grid = (pl.cdiv(n, tile_q), pl.cdiv(m, tile_m))
    kern = functools.partial(_knn_top3_kernel, tile_m=tile_m, m_total=m)
    return pl.pallas_call(
        kern,
        out_shape=(jax.ShapeDtypeStruct((KNN_K, n), jnp.float32),
                   jax.ShapeDtypeStruct((KNN_K, n), jnp.int32)),
        grid=grid,
        in_specs=[
            pl.BlockSpec((3, tile_q), lambda i, j: (0, i)),
            pl.BlockSpec((1, tile_q), lambda i, j: (0, i)),
            pl.BlockSpec((tile_m, 3), lambda i, j: (j, 0)),
            pl.BlockSpec((tile_m, 1), lambda i, j: (j, 0)),
        ],
        out_specs=(pl.BlockSpec((KNN_K, tile_q), lambda i, j: (0, i)),
                   pl.BlockSpec((KNN_K, tile_q), lambda i, j: (0, i))),
        scratch_shapes=[pltpu.VMEM((KNN_K, tile_q), jnp.float32),
                        pltpu.VMEM((KNN_K, tile_q), jnp.int32)],
        compiler_params=pltpu.CompilerParams(
            dimension_semantics=("parallel", "arbitrary"),
            vmem_limit_bytes=VMEM_LIMIT),
    )(jnp.transpose(qxyz), qbatch.reshape(1, n), sxyz, sbatch.reshape(m, 1))


# ---------------------------------------------------------------------------
# Kernel 3: streaming weighted gather (transposed) + fused linear1 base
# ---------------------------------------------------------------------------
def _knn_gather_base_kernel(sup_ref, g_ref, b_ref, w1_ref, bias_ref,
                            w3_ref, idx3_ref, sfeat_ref, o_ref, acc_ref,
                            *, tile_m, m_total):
    mi = pl.program_id(1)

    @pl.when(mi == 0)
    def _():
        # fused self.linear1: residual base stays in VMEM, never hits HBM.
        base = _layernorm_linear(sup_ref[...], g_ref[...], b_ref[...],
                                 w1_ref[...], bias_ref[...])     # [TQ, C]
        acc_ref[...] = base.T                                    # [C, TQ]

    sfeat = sfeat_ref[...]                                       # [C, TM]
    w3 = w3_ref[...]                                             # [K, TQ]
    idx3 = idx3_ref[...]                                         # [K, TQ]
    c, tm = sfeat.shape
    tq = w3.shape[1]

    # zero out the padding columns of a (possibly partial) source tile.
    col = lax.broadcasted_iota(jnp.int32, (1, tm), 1) + mi * tile_m
    sfeat = jnp.where(col < m_total, sfeat, jnp.zeros_like(sfeat))

    # transposed weighted-selection matrix sel_t[TM, TQ], built directly in
    # the feature dtype (bf16 on the fast path) with chained selects.
    riota = lax.broadcasted_iota(jnp.int32, (tm, 1), 0) + mi * tile_m
    wdt = w3.astype(sfeat.dtype)
    zero = jnp.zeros((), sfeat.dtype)
    sel = jnp.where(riota == idx3[0:1, :], wdt[0:1, :], zero)
    sel = jnp.where(riota == idx3[1:2, :], wdt[1:2, :], sel)
    sel = jnp.where(riota == idx3[2:3, :], wdt[2:3, :], sel)

    # transposed gather matmul: MXU N dim = TQ (wide), output lane-dense.
    acc_ref[...] += jnp.dot(sfeat, sel, preferred_element_type=jnp.float32)

    @pl.when(mi == pl.num_programs(1) - 1)
    def _():
        o_ref[...] = acc_ref[...].astype(o_ref.dtype)


def knn_gather_add_base(support_feats, ln1_g, ln1_b, w1, b1, w3_t, idx3_t,
                        sfeat_t, *, tile_q=1024, tile_m=512,
                        out_dtype=jnp.float32):
    n, c_out = support_feats.shape
    m = sfeat_t.shape[1]
    tile_q = min(tile_q, _round_up(n, 128))
    tile_m = min(tile_m, _round_up(m, 128))
    grid = (pl.cdiv(n, tile_q), pl.cdiv(m, tile_m))
    kern = functools.partial(_knn_gather_base_kernel, tile_m=tile_m, m_total=m)
    out_t = pl.pallas_call(
        kern,
        out_shape=jax.ShapeDtypeStruct((c_out, n), out_dtype),
        grid=grid,
        in_specs=[
            pl.BlockSpec((tile_q, c_out), lambda i, j: (i, 0)),
            pl.BlockSpec((1, c_out), lambda i, j: (0, 0)),
            pl.BlockSpec((1, c_out), lambda i, j: (0, 0)),
            pl.BlockSpec((c_out, c_out), lambda i, j: (0, 0)),
            pl.BlockSpec((1, c_out), lambda i, j: (0, 0)),
            pl.BlockSpec((KNN_K, tile_q), lambda i, j: (0, i)),
            pl.BlockSpec((KNN_K, tile_q), lambda i, j: (0, i)),
            pl.BlockSpec((c_out, tile_m), lambda i, j: (0, j)),
        ],
        out_specs=pl.BlockSpec((c_out, tile_q), lambda i, j: (0, i)),
        scratch_shapes=[pltpu.VMEM((c_out, tile_q), jnp.float32)],
        compiler_params=pltpu.CompilerParams(
            dimension_semantics=("parallel", "arbitrary"),
            vmem_limit_bytes=VMEM_LIMIT),
    )(support_feats, ln1_g.reshape(1, -1), ln1_b.reshape(1, -1), w1,
      b1.reshape(1, -1), w3_t, idx3_t, sfeat_t)
    return jnp.transpose(out_t)                                  # [N, C]


# ---------------------------------------------------------------------------
# Module glue
# ---------------------------------------------------------------------------
def offsets_to_batch(offset, n):
    # offset holds cumulative per-batch point counts (pointops convention)
    return jnp.searchsorted(offset, jnp.arange(n), side="right").astype(jnp.int32)


def upsample_forward(params, feats, xyz, support_xyz, offset, support_offset,
                     support_feats, *, feat_dtype=jnp.bfloat16,
                     tile_q=1024, tile_m=512, tile_rows=1024):
    n = support_xyz.shape[0]
    m = xyz.shape[0]
    # self.linear2(feats): LN(in_ch) + Linear(in_ch -> out_ch), emitted as
    # [out_ch, M] (lane-dense) once per source point; bf16 halves the streamed
    # gather bandwidth (use feat_dtype=jnp.float32 for bit-tight validation).
    sfeat_t = ln_linear_t(feats, params["ln2_g"], params["ln2_b"],
                          params["w2"], params["b2"],
                          tile_rows=tile_rows, out_dtype=feat_dtype)
    qbatch = offsets_to_batch(support_offset, n)
    sbatch = offsets_to_batch(offset, m)
    # streaming batch-aware 3-NN search (lane-dense [K, N] weights/indices),
    # then one transposed weighted gather matmul with the self.linear1
    # residual base fused in.
    w3_t, idx3_t = knn_top3(support_xyz, qbatch, xyz, sbatch,
                            tile_q=tile_q, tile_m=tile_m)
    out = knn_gather_add_base(support_feats, params["ln1_g"], params["ln1_b"],
                              params["w1"], params["b1"], w3_t, idx3_t,
                              sfeat_t, tile_q=tile_q, tile_m=tile_m)
    return out, support_xyz, support_offset


# ---------------------------------------------------------------------------
# Pure-JAX reference (for verification)
# ---------------------------------------------------------------------------
def upsample_reference(params, feats, xyz, support_xyz, offset, support_offset,
                       support_feats):
    def ln(x, g, b):
        mu = x.mean(-1, keepdims=True)
        var = ((x - mu) ** 2).mean(-1, keepdims=True)
        return (x - mu) / jnp.sqrt(var + LN_EPS) * g + b

    lin1 = ln(support_feats, params["ln1_g"], params["ln1_b"]) @ params["w1"] + params["b1"]
    lin2 = ln(feats, params["ln2_g"], params["ln2_b"]) @ params["w2"] + params["b2"]
    qb = offsets_to_batch(support_offset, support_xyz.shape[0])
    sb = offsets_to_batch(offset, xyz.shape[0])
    d2 = ((support_xyz[:, None, :] - xyz[None, :, :]) ** 2).sum(-1)
    dist = jnp.where(qb[:, None] == sb[None, :],
                     jnp.sqrt(jnp.maximum(d2, 0.0)), BIG_DIST)
    idx = jnp.argsort(dist, axis=1)[:, :KNN_K]
    d3 = jnp.take_along_axis(dist, idx, axis=1)
    w = 1.0 / (d3 + 1e-8)
    w = w / w.sum(-1, keepdims=True)
    interp = (lin2[idx] * w[..., None]).sum(1)
    return lin1 + interp


if __name__ == "__main__":
    key = jax.random.PRNGKey(0)
    in_channels, out_channels = 32, 16
    M, N = 64, 128  # coarse / fine point counts (2 "batches" via offsets)

    ks = jax.random.split(key, 8)
    feats = jax.random.normal(ks[0], (M, in_channels), jnp.float32)
    support_feats = jax.random.normal(ks[1], (N, out_channels), jnp.float32)
    xyz = jax.random.uniform(ks[2], (M, 3), jnp.float32)
    support_xyz = jax.random.uniform(ks[3], (N, 3), jnp.float32)
    offset = jnp.array([M // 2, M], jnp.int32)            # cumulative counts
    support_offset = jnp.array([N // 2, N], jnp.int32)

    # deterministic parameter init (LN gamma=1, beta=0; linears small random).
    # nn.Linear weights are stored [out, in] in torch; we keep them as [in, out].
    params = {
        "ln1_g": jnp.ones((out_channels,), jnp.float32),
        "ln1_b": jnp.zeros((out_channels,), jnp.float32),
        "w1": 0.1 * jax.random.normal(ks[4], (out_channels, out_channels), jnp.float32),
        "b1": 0.1 * jax.random.normal(ks[5], (out_channels,), jnp.float32),
        "ln2_g": jnp.ones((in_channels,), jnp.float32),
        "ln2_b": jnp.zeros((in_channels,), jnp.float32),
        "w2": 0.1 * jax.random.normal(ks[6], (in_channels, out_channels), jnp.float32),
        "b2": 0.1 * jax.random.normal(ks[7], (out_channels,), jnp.float32),
    }

    ref = upsample_reference(
        params, feats, xyz, support_xyz, offset, support_offset, support_feats)

    # f32 feature path: tight check against the pure-JAX reference.
    out_f32, sxyz_out, soff_out = upsample_forward(
        params, feats, xyz, support_xyz, offset, support_offset, support_feats,
        feat_dtype=jnp.float32)
    jax.block_until_ready(out_f32)
    assert out_f32.shape == (N, out_channels)
    assert jnp.allclose(out_f32, ref, rtol=1e-4, atol=1e-4), \
        float(jnp.max(jnp.abs(out_f32 - ref)))

    # bf16 streaming path (default, bandwidth-optimized): looser tolerance.
    out_bf16, _, _ = upsample_forward(
        params, feats, xyz, support_xyz, offset, support_offset, support_feats,
        feat_dtype=jnp.bfloat16)
    jax.block_until_ready(out_bf16)
    assert out_bf16.shape == (N, out_channels)
    assert jnp.allclose(out_bf16, ref, rtol=1e-1, atol=1e-1), \
        float(jnp.max(jnp.abs(out_bf16 - ref)))

    print("KERNEL_OK")
</pallas_src>

<mosaic_0001>
module attributes {stable_mosaic.version = 11 : i64} {
  func.func @_ln_linear_t_kernel(%arg0: i32, %arg1: memref<128x32xf32, #tpu.memory_space<vmem>>, %arg2: memref<1x32xf32, #tpu.memory_space<vmem>>, %arg3: memref<1x32xf32, #tpu.memory_space<vmem>>, %arg4: memref<32x16xf32, #tpu.memory_space<vmem>>, %arg5: memref<1x16xf32, #tpu.memory_space<vmem>>, %arg6: memref<16x128xf32, #tpu.memory_space<vmem>>) attributes {dimension_semantics = [#tpu.dimension_semantics<parallel>], iteration_bounds = array<i64: 1>, scalar_prefetch = 0 : i64, scratch_operands = 0 : i64, tpu.core_type = #tpu.core_type<tc>, window_params = [{transform_indices = @transform_0, window_bounds = array<i64: 128, 32>}, {pipeline_mode = #tpu.pipeline_mode<synchronous>, transform_indices = @transform_1, window_bounds = array<i64: 1, 32>}, {pipeline_mode = #tpu.pipeline_mode<synchronous>, transform_indices = @transform_2, window_bounds = array<i64: 1, 32>}, {pipeline_mode = #tpu.pipeline_mode<synchronous>, transform_indices = @transform_3, window_bounds = array<i64: 32, 16>}, {pipeline_mode = #tpu.pipeline_mode<synchronous>, transform_indices = @transform_4, window_bounds = array<i64: 1, 16>}, {transform_indices = @transform_5, window_bounds = array<i64: 16, 128>}]} {
    %c0 = arith.constant 0 : index
    %c0_0 = arith.constant 0 : index
    %0 = vector.load %arg1[%c0, %c0_0] : memref<128x32xf32, #tpu.memory_space<vmem>>, vector<128x32xf32>
    %c0_1 = arith.constant 0 : index
    %c0_2 = arith.constant 0 : index
    %1 = vector.load %arg2[%c0_1, %c0_2] : memref<1x32xf32, #tpu.memory_space<vmem>>, vector<1x32xf32>
    %c0_3 = arith.constant 0 : index
    %c0_4 = arith.constant 0 : index
    %2 = vector.load %arg3[%c0_3, %c0_4] : memref<1x32xf32, #tpu.memory_space<vmem>>, vector<1x32xf32>
    %c0_5 = arith.constant 0 : index
    %c0_6 = arith.constant 0 : index
    %3 = vector.load %arg4[%c0_5, %c0_6] : memref<32x16xf32, #tpu.memory_space<vmem>>, vector<32x16xf32>
    %c0_7 = arith.constant 0 : index
    %c0_8 = arith.constant 0 : index
    %4 = vector.load %arg5[%c0_7, %c0_8] : memref<1x16xf32, #tpu.memory_space<vmem>>, vector<1x16xf32>
    %cst = arith.constant dense<0.000000e+00> : vector<128xf32>
    %5 = vector.multi_reduction <add>, %0, %cst [1] : vector<128x32xf32> to vector<128xf32>
    %6 = vector.shape_cast %5 : vector<128xf32> to vector<128x1xf32>
    %cst_9 = arith.constant 3.125000e-02 : f32
    %7 = vector.broadcast %cst_9 : f32 to vector<128x1xf32>
    %8 = arith.mulf %6, %7 : vector<128x1xf32>
    %9 = vector.broadcast %8 : vector<128x1xf32> to vector<128x32xf32>
    %10 = arith.subf %0, %9 : vector<128x32xf32>
    %11 = arith.mulf %10, %10 : vector<128x32xf32>
    %cst_10 = arith.constant dense<0.000000e+00> : vector<128xf32>
    %12 = vector.multi_reduction <add>, %11, %cst_10 [1] : vector<128x32xf32> to vector<128xf32>
    %13 = vector.shape_cast %12 : vector<128xf32> to vector<128x1xf32>
    %cst_11 = arith.constant 3.125000e-02 : f32
    %14 = vector.broadcast %cst_11 : f32 to vector<128x1xf32>
    %15 = arith.mulf %13, %14 : vector<128x1xf32>
    %cst_12 = arith.constant 9.99999974E-6 : f32
    %16 = vector.broadcast %cst_12 : f32 to vector<128x1xf32>
    %17 = arith.addf %15, %16 : vector<128x1xf32>
    %18 = math.rsqrt %17 : vector<128x1xf32>
    %19 = vector.broadcast %18 : vector<128x1xf32> to vector<128x32xf32>
    %20 = arith.mulf %10, %19 : vector<128x32xf32>
    %21 = vector.broadcast %1 : vector<1x32xf32> to vector<128x32xf32>
    %22 = arith.mulf %20, %21 : vector<128x32xf32>
    %23 = vector.broadcast %2 : vector<1x32xf32> to vector<128x32xf32>
    %24 = arith.addf %22, %23 : vector<128x32xf32>
    %cst_13 = arith.constant dense<0.000000e+00> : vector<128x16xf32>
    %25 = tpu.matmul %24, %3, %cst_13 {dimension_numbers = #tpu.dot_dimension_numbers<[1], [0], [0], [1], [0, 0, 1, 1], [], []>} : vector<128x32xf32>, vector<32x16xf32>, vector<128x16xf32> -> vector<128x16xf32>
    %26 = vector.broadcast %4 : vector<1x16xf32> to vector<128x16xf32>
    %27 = arith.addf %25, %26 : vector<128x16xf32>
    %28 = tpu.transpose %27, [1, 0] : vector<128x16xf32> -> vector<16x128xf32>
    %c0_14 = arith.constant 0 : index
    %c0_15 = arith.constant 0 : index
    %29 = vector.load %arg6[%c0_14, %c0_15] : memref<16x128xf32, #tpu.memory_space<vmem>>, vector<16x128xf32>
    tpu.vector_store %arg6[%c0_14, %c0_15], %28 {strides = array<i32>} : memref<16x128xf32, #tpu.memory_space<vmem>>, vector<16x128xf32>,
    return
  }
  func.func @transform_0(%arg0: i32) -> (i32, i32) {
    %c0_i32 = arith.constant 0 : i32
    %c0_i32_0 = arith.constant 0 : i32
    return %arg0, %c0_i32 : i32, i32
  }
  func.func @transform_1(%arg0: i32) -> (i32, i32) {
    %c0_i32 = arith.constant 0 : i32
    %c0_i32_0 = arith.constant 0 : i32
    %c0_i32_1 = arith.constant 0 : i32
    return %c0_i32, %c0_i32_0 : i32, i32
  }
  func.func @transform_2(%arg0: i32) -> (i32, i32) {
    %c0_i32 = arith.constant 0 : i32
    %c0_i32_0 = arith.constant 0 : i32
    %c0_i32_1 = arith.constant 0 : i32
    return %c0_i32, %c0_i32_0 : i32, i32
  }
  func.func @transform_3(%arg0: i32) -> (i32, i32) {
    %c0_i32 = arith.constant 0 : i32
    %c0_i32_0 = arith.constant 0 : i32
    %c0_i32_1 = arith.constant 0 : i32
    return %c0_i32, %c0_i32_0 : i32, i32
  }
  func.func @transform_4(%arg0: i32) -> (i32, i32) {
    %c0_i32 = arith.constant 0 : i32
    %c0_i32_0 = arith.constant 0 : i32
    %c0_i32_1 = arith.constant 0 : i32
    return %c0_i32, %c0_i32_0 : i32, i32
  }
  func.func @transform_5(%arg0: i32) -> (i32, i32) {
    %c0_i32 = arith.constant 0 : i32
    %c0_i32_0 = arith.constant 0 : i32
    return %c0_i32, %arg0 : i32, i32
  }
}

</mosaic_0001>

<llo_original>
// kernel: tpu_custom_call.1
$region0: #{tpu_custom_call.1}
  #allocation0 [shape = 'u32[]', space=smem, size = 0x4, offset = 0x4, fixed_abs, tag = 'smem constant byte address 0x4 - core index']
  #allocation1 [shape = 'u32[144,128]{1,0:T(1,128)}', space=vmem, size = 0x12000, scoped, tag = 'internal scratch']
  %s0 = inlined_call_operand.vmem [shape: f32[64,32], index: 0, kind: input, shape index: {}]
  %s1 = inlined_call_operand.vmem [shape: f32[1,32], index: 1, kind: input, shape index: {}]
  %s2 = inlined_call_operand.vmem [shape: f32[1,32], index: 2, kind: input, shape index: {}]
  %s3 = inlined_call_operand.vmem [shape: f32[32,16], index: 3, kind: input, shape index: {}]
  %s4 = inlined_call_operand.vmem [shape: f32[1,16], index: 4, kind: input, shape index: {}]
  %s5 = inlined_call_operand.hbm [shape: f32[16,64], index: 5, kind: output, shape index: {}]
  %s6 = sld [smem:[#allocation0]]
  $region30: #{tpu_custom_call.1} parent=0
    _
  %s8 = ssub.s32 1, %s6
  %s9 = scalar_select 0, %s8, %s6
  $region1: #{tpu_custom_call.1} parent=0
    #allocation2 [shape = 'u8[8192]{0}', space=vmem, size = 0x2000, scoped, tag = 'output window, operand 0, single buffered']
    #allocation3 [shape = 's32[1]{0}', space=sflag, size = 0x4, scoped, tag = 'scoped memory for tpu_custom_call.1']
    %10 = vsyncpa [#allocation3], 0
    // Predicated region
    $region2: #{tpu_custom_call.1} parent=1 // pred_check
      _
    $region3: #{tpu_custom_call.1} parent=1 // pred_check_branch
      %12 = sbr.rel (0) target = $region5
    $region4: #{tpu_custom_call.1} parent=1 // pred_region
      _
    $region5: #{tpu_custom_call.1} parent=1 // pred_fallthru
      _
    // Predicated region
    $region6: #{tpu_custom_call.1} parent=1 // pred_check
      _
    $region7: #{tpu_custom_call.1} parent=1 // pred_check_branch
      %14 = sbr.rel (0) target = $region9
    $region8: #{tpu_custom_call.1} parent=1 // pred_region
      _
    $region9: #{tpu_custom_call.1} parent=1 // pred_fallthru
      _
    // Predicated region
    $region10: #{tpu_custom_call.1} parent=1 // pred_check
      _
    $region11: #{tpu_custom_call.1} parent=1 // pred_check_branch
      %16 = sbr.rel (0) target = $region13
    $region12: #{tpu_custom_call.1} parent=1 // pred_region
      _
    $region13: #{tpu_custom_call.1} parent=1 // pred_fallthru
      _
    // Predicated region
    $region14: #{tpu_custom_call.1} parent=1 // pred_check
      _
    $region15: #{tpu_custom_call.1} parent=1 // pred_check_branch
      %18 = sbr.rel (0) target = $region17
    $region16: #{tpu_custom_call.1} parent=1 // pred_region
      _
    $region17: #{tpu_custom_call.1} parent=1 // pred_fallthru
      _
    // Predicated region
    $region18: #{tpu_custom_call.1} parent=1 // pred_check
      _
    $region19: #{tpu_custom_call.1} parent=1 // pred_check_branch
      %20 = sbr.rel (0) target = $region21
    $region20: #{tpu_custom_call.1} parent=1 // pred_region
      _
    $region21: #{tpu_custom_call.1} parent=1 // pred_fallthru
      _
    %v21 = vld [vmem:[%s0] sm:$0xff]
    %v22 = vld [vmem:[%s0 + $0x8] sm:$0xff]
    %v23 = vld [vmem:[%s0 + $0x10] sm:$0xff]
    %v24 = vld [vmem:[%s0 + $0x18] sm:$0xff]
    %v25 = vld [vmem:[%s0 + $0x20] sm:$0xff]
    %v26 = vld [vmem:[%s0 + $0x28] sm:$0xff]
    %v27 = vld [vmem:[%s0 + $0x30] sm:$0xff]
    %v28 = vld [vmem:[%s0 + $0x38] sm:$0xff]
    %v29 = vld [vmem:[%s0 + $0x40] sm:$0xff]
    %v30 = vld [vmem:[%s0 + $0x48] sm:$0xff]
    %v31 = vld [vmem:[%s0 + $0x50] sm:$0xff]
    %v32 = vld [vmem:[%s0 + $0x58] sm:$0xff]
    %v33 = vld [vmem:[%s0 + $0x60] sm:$0xff]
    %v34 = vld [vmem:[%s0 + $0x68] sm:$0xff]
    %v35 = vld [vmem:[%s0 + $0x70] sm:$0xff]
    %v36 = vld [vmem:[%s0 + $0x78] sm:$0xff]
    %v37 = vld [vmem:[%s1] sm:$0x1]
    %v38 = vld [vmem:[%s2] sm:$0x1]
    %v39 = vld [vmem:[%s3] sm:$0xff]
    %v40 = vld [vmem:[%s3 + $0x8] sm:$0xff]
    %v41 = vld [vmem:[%s3 + $0x10] sm:$0xff]
    %v42 = vld [vmem:[%s3 + $0x18] sm:$0xff]
    %v43 = vld [vmem:[%s4] sm:$0x1]
    %vm44 = vcmask 261120
    %v45 = vsel %vm44, %v21, 0.0
    %46 = vadd.xlane.f32.xlu0 %v45
    %v47 = vpop.xlane.xlu0 %46
    %v48 = vsel %vm44, %v22, 0.0
    %49 = vadd.xlane.f32.xlu0 %v48
    %v50 = vpop.xlane.xlu0 %49
    %v51 = vsel %vm44, %v23, 0.0
    %52 = vadd.xlane.f32.xlu0 %v51
    %v53 = vpop.xlane.xlu0 %52
    %v54 = vsel %vm44, %v24, 0.0
    %55 = vadd.xlane.f32.xlu0 %v54
    %v56 = vpop.xlane.xlu0 %55
    %v57 = vsel %vm44, %v25, 0.0
    %58 = vadd.xlane.f32.xlu0 %v57
    %v59 = vpop.xlane.xlu0 %58
    %v60 = vsel %vm44, %v26, 0.0
    %61 = vadd.xlane.f32.xlu0 %v60
    %v62 = vpop.xlane.xlu0 %61
    %v63 = vsel %vm44, %v27, 0.0
    %64 = vadd.xlane.f32.xlu0 %v63
    %v65 = vpop.xlane.xlu0 %64
    %v66 = vsel %vm44, %v28, 0.0
    %67 = vadd.xlane.f32.xlu0 %v66
    %v68 = vpop.xlane.xlu0 %67
    %v69 = vsel %vm44, %v29, 0.0
    %70 = vadd.xlane.f32.xlu0 %v69
    %v71 = vpop.xlane.xlu0 %70
    %v72 = vsel %vm44, %v30, 0.0
    %73 = vadd.xlane.f32.xlu0 %v72
    %v74 = vpop.xlane.xlu0 %73
    %v75 = vsel %vm44, %v31, 0.0
    %76 = vadd.xlane.f32.xlu0 %v75
    %v77 = vpop.xlane.xlu0 %76
    %v78 = vsel %vm44, %v32, 0.0
    %79 = vadd.xlane.f32.xlu0 %v78
    %v80 = vpop.xlane.xlu0 %79
    %v81 = vsel %vm44, %v33, 0.0
    %82 = vadd.xlane.f32.xlu0 %v81
    %v83 = vpop.xlane.xlu0 %82
    %v84 = vsel %vm44, %v34, 0.0
    %85 = vadd.xlane.f32.xlu0 %v84
    %v86 = vpop.xlane.xlu0 %85
    %v87 = vsel %vm44, %v35, 0.0
    %88 = vadd.xlane.f32.xlu0 %v87
    %v89 = vpop.xlane.xlu0 %88
    %v90 = vsel %vm44, %v36, 0.0
    %91 = vadd.xlane.f32.xlu0 %v90
    %v92 = vpop.xlane.xlu0 %91
    %v93 = vmul.f32 %v47, 0.03125
    %v94 = vmul.f32 %v50, 0.03125
    %v95 = vmul.f32 %v53, 0.03125
    %v96 = vmul.f32 %v56, 0.03125
    %v97 = vmul.f32 %v59, 0.03125
    %v98 = vmul.f32 %v62, 0.03125
    %v99 = vmul.f32 %v65, 0.03125
    %v100 = vmul.f32 %v68, 0.03125
    %v101 = vmul.f32 %v71, 0.03125
    %v102 = vmul.f32 %v74, 0.03125
    %v103 = vmul.f32 %v77, 0.03125
    %v104 = vmul.f32 %v80, 0.03125
    %v105 = vmul.f32 %v83, 0.03125
    %v106 = vmul.f32 %v86, 0.03125
    %v107 = vmul.f32 %v89, 0.03125
    %v108 = vmul.f32 %v92, 0.03125
    %v109 = vsub.f32 %v21, %v93
    %v110 = vsub.f32 %v22, %v94
    %v111 = vsub.f32 %v23, %v95
    %v112 = vsub.f32 %v24, %v96
    %v113 = vsub.f32 %v25, %v97
    %v114 = vsub.f32 %v26, %v98
    %v115 = vsub.f32 %v27, %v99
    %v116 = vsub.f32 %v28, %v100
    %v117 = vsub.f32 %v29, %v101
    %v118 = vsub.f32 %v30, %v102
    %v119 = vsub.f32 %v31, %v103
    %v120 = vsub.f32 %v32, %v104
    %v121 = vsub.f32 %v33, %v105
    %v122 = vsub.f32 %v34, %v106
    %v123 = vsub.f32 %v35, %v107
    %v124 = vsub.f32 %v36, %v108
    %v125 = vmul.f32 %v109, %v109
    %v126 = vmul.f32 %v110, %v110
    %v127 = vmul.f32 %v111, %v111
    %v128 = vmul.f32 %v112, %v112
    %v129 = vmul.f32 %v113, %v113
    %v130 = vmul.f32 %v114, %v114
    %v131 = vmul.f32 %v115, %v115
    %v132 = vmul.f32 %v116, %v116
    %v133 = vmul.f32 %v117, %v117
    %v134 = vmul.f32 %v118, %v118
    %v135 = vmul.f32 %v119, %v119
    %v136 = vmul.f32 %v120, %v120
    %v137 = vmul.f32 %v121, %v121
    %v138 = vmul.f32 %v122, %v122
    %v139 = vmul.f32 %v123, %v123
    %v140 = vmul.f32 %v124, %v124
    %v141 = vsel %vm44, %v125, 0.0
    %142 = vadd.xlane.f32.xlu0 %v141
    %v143 = vpop.xlane.xlu0 %142
    %v144 = vsel %vm44, %v126, 0.0
    %145 = vadd.xlane.f32.xlu0 %v144
    %v146 = vpop.xlane.xlu0 %145
    %v147 = vsel %vm44, %v127, 0.0
    %148 = vadd.xlane.f32.xlu0 %v147
    %v149 = vpop.xlane.xlu0 %148
    %v150 = vsel %vm44, %v128, 0.0
    %151 = vadd.xlane.f32.xlu0 %v150
    %v152 = vpop.xlane.xlu0 %151
    %v153 = vsel %vm44, %v129, 0.0
    %154 = vadd.xlane.f32.xlu0 %v153
    %v155 = vpop.xlane.xlu0 %154
    %v156 = vsel %vm44, %v130, 0.0
    %157 = vadd.xlane.f32.xlu0 %v156
    %v158 = vpop.xlane.xlu0 %157
    %v159 = vsel %vm44, %v131, 0.0
    %160 = vadd.xlane.f32.xlu0 %v159
    %v161 = vpop.xlane.xlu0 %160
    %v162 = vsel %vm44, %v132, 0.0
    %163 = vadd.xlane.f32.xlu0 %v162
    %v164 = vpop.xlane.xlu0 %163
    %v165 = vsel %vm44, %v133, 0.0
    %166 = vadd.xlane.f32.xlu0 %v165
    %v167 = vpop.xlane.xlu0 %166
    %v168 = vsel %vm44, %v134, 0.0
    %169 = vadd.xlane.f32.xlu0 %v168
    %v170 = vpop.xlane.xlu0 %169
    %v171 = vsel %vm44, %v135, 0.0
    %172 = vadd.xlane.f32.xlu0 %v171
    %v173 = vpop.xlane.xlu0 %172
    %v174 = vsel %vm44, %v136, 0.0
    %175 = vadd.xlane.f32.xlu0 %v174
    %v176 = vpop.xlane.xlu0 %175
    %v177 = vsel %vm44, %v137, 0.0
    %178 = vadd.xlane.f32.xlu0 %v177
    %v179 = vpop.xlane.xlu0 %178
    %v180 = vsel %vm44, %v138, 0.0
    %181 = vadd.xlane.f32.xlu0 %v180
    %v182 = vpop.xlane.xlu0 %181
    %v183 = vsel %vm44, %v139, 0.0
    %184 = vadd.xlane.f32.xlu0 %v183
    %v185 = vpop.xlane.xlu0 %184
    %v186 = vsel %vm44, %v140, 0.0
    %187 = vadd.xlane.f32.xlu0 %v186
    %v188 = vpop.xlane.xlu0 %187
    %v189 = vmul.f32 %v143, 0.03125
    %v190 = vmul.f32 %v146, 0.03125
    %v191 = vmul.f32 %v149, 0.03125
    %v192 = vmul.f32 %v152, 0.03125
    %v193 = vmul.f32 %v155, 0.03125
    %v194 = vmul.f32 %v158, 0.03125
    %v195 = vmul.f32 %v161, 0.03125
    %v196 = vmul.f32 %v164, 0.03125
    %v197 = vmul.f32 %v167, 0.03125
    %v198 = vmul.f32 %v170, 0.03125
    %v199 = vmul.f32 %v173, 0.03125
    %v200 = vmul.f32 %v176, 0.03125
    %v201 = vmul.f32 %v179, 0.03125
    %v202 = vmul.f32 %v182, 0.03125
    %v203 = vmul.f32 %v185, 0.03125
    %v204 = vmul.f32 %v188, 0.03125
    %v205 = vadd.f32 %v189, 1e-05
    %v206 = vadd.f32 %v190, 1e-05
    %v207 = vadd.f32 %v191, 1e-05
    %v208 = vadd.f32 %v192, 1e-05
    %v209 = vadd.f32 %v193, 1e-05
    %v210 = vadd.f32 %v194, 1e-05
    %v211 = vadd.f32 %v195, 1e-05
    %v212 = vadd.f32 %v196, 1e-05
    %v213 = vadd.f32 %v197, 1e-05
    %v214 = vadd.f32 %v198, 1e-05
    %v215 = vadd.f32 %v199, 1e-05
    %v216 = vadd.f32 %v200, 1e-05
    %v217 = vadd.f32 %v201, 1e-05
    %v218 = vadd.f32 %v202, 1e-05
    %v219 = vadd.f32 %v203, 1e-05
    %v220 = vadd.f32 %v204, 1e-05
    %v221 = vrsqrt.pop %v205
    %v222 = vrsqrt.pop %v206
    %v223 = vrsqrt.pop %v207
    %v224 = vrsqrt.pop %v208
    %v225 = vrsqrt.pop %v209
    %v226 = vrsqrt.pop %v210
    %v227 = vrsqrt.pop %v211
    %v228 = vrsqrt.pop %v212
    %v229 = vrsqrt.pop %v213
    %v230 = vrsqrt.pop %v214
    %v231 = vrsqrt.pop %v215
    %v232 = vrsqrt.pop %v216
    %v233 = vrsqrt.pop %v217
    %v234 = vrsqrt.pop %v218
    %v235 = vrsqrt.pop %v219
    %v236 = vrsqrt.pop %v220
    %v237 = vmul.f32 %v109, %v221
    %v238 = vmul.f32 %v110, %v222
    %v239 = vmul.f32 %v111, %v223
    %v240 = vmul.f32 %v112, %v224
    %v241 = vmul.f32 %v113, %v225
    %v242 = vmul.f32 %v114, %v226
    %v243 = vmul.f32 %v115, %v227
    %v244 = vmul.f32 %v116, %v228
    %v245 = vmul.f32 %v117, %v229
    %v246 = vmul.f32 %v118, %v230
    %v247 = vmul.f32 %v119, %v231
    %v248 = vmul.f32 %v120, %v232
    %v249 = vmul.f32 %v121, %v233
    %v250 = vmul.f32 %v122, %v234
    %v251 = vmul.f32 %v123, %v235
    %v252 = vmul.f32 %v124, %v236
    %v254 = vlaneseq
    %v255 = vshrl.u32 %v254, 7
    %v256 = vsub.s32 0, %v255
    %v257 = vrot.slane %v37, %v256
    %v259 = vmul.f32 %v237, %v257
    %v260 = vmul.f32 %v238, %v257
    %v261 = vmul.f32 %v239, %v257
    %v262 = vmul.f32 %v240, %v257
    %v263 = vmul.f32 %v241, %v257
    %v264 = vmul.f32 %v242, %v257
    %v265 = vmul.f32 %v243, %v257
    %v266 = vmul.f32 %v244, %v257
    %v267 = vmul.f32 %v245, %v257
    %v268 = vmul.f32 %v246, %v257
    %v269 = vmul.f32 %v247, %v257
    %v270 = vmul.f32 %v248, %v257
    %v271 = vmul.f32 %v249, %v257
    %v272 = vmul.f32 %v250, %v257
    %v273 = vmul.f32 %v251, %v257
    %v274 = vmul.f32 %v252, %v257
    %v276 = vlaneseq
    %v277 = vshrl.u32 %v276, 7
    %v278 = vsub.s32 0, %v277
    %v279 = vrot.slane %v38, %v278
    %v281 = vadd.f32 %v259, %v279
    %v282 = vadd.f32 %v260, %v279
    %v283 = vadd.f32 %v261, %v279
    %v284 = vadd.f32 %v262, %v279
    %v285 = vadd.f32 %v263, %v279
    %v286 = vadd.f32 %v264, %v279
    %v287 = vadd.f32 %v265, %v279
    %v288 = vadd.f32 %v266, %v279
    %v289 = vadd.f32 %v267, %v279
    %v290 = vadd.f32 %v268, %v279
    %v291 = vadd.f32 %v269, %v279
    %v292 = vadd.f32 %v270, %v279
    %v293 = vadd.f32 %v271, %v279
    %v294 = vadd.f32 %v272, %v279
    %v295 = vadd.f32 %v273, %v279
    %v296 = vadd.f32 %v274, %v279
    %v298 = vlaneseq
    %v299 = vshrl.u32 %v298, 7
    %v300 = vsub.s32 0, %v299
    %v301 = vrot.slane %v43, %v300
    %v304 = vsel %vm44, %v281, 0
    %v307 = vsel %vm44, %v282, 0
    %v310 = vsel %vm44, %v283, 0
    %v313 = vsel %vm44, %v284, 0
    %v316 = vsel %vm44, %v285, 0
    %v319 = vsel %vm44, %v286, 0
    %v322 = vsel %vm44, %v287, 0
    %v325 = vsel %vm44, %v288, 0
    %v328 = vsel %vm44, %v289, 0
    %v331 = vsel %vm44, %v290, 0
    %v334 = vsel %vm44, %v291, 0
    %v337 = vsel %vm44, %v292, 0
    %v340 = vsel %vm44, %v293, 0
    %v343 = vsel %vm44, %v294, 0
    %v346 = vsel %vm44, %v295, 0
    %v349 = vsel %vm44, %v296, 0
    %351 = vmatprep.subr.mxu0 0.0
    %352 = vmatpush1.msra.mxu0 0.0
    %353 = vmatprep.subr.mxu0 0.0
    %354 = vmatpush1.msra.mxu0 0.0
    %355 = vmatprep.subr.mxu0 0.0
    %356 = vmatpush1.msra.mxu0 0.0
    %357 = vmatprep.subr.mxu0 0.0
    %358 = vmatpush1.msra.mxu0 0.0
    %359 = vmatprep.subr.mxu0 0.0
    %360 = vmatpush1.msra.mxu0 0.0
    %361 = vmatprep.subr.mxu0 0.0
    %362 = vmatpush1.msra.mxu0 0.0
    %363 = vmatprep.subr.mxu0 0.0
    %364 = vmatpush1.msra.mxu0 0.0
    %365 = vmatprep.subr.mxu0 0.0
    %366 = vmatpush1.msra.mxu0 0.0
    %367 = vmatprep.subr.mxu0 0.0
    %368 = vmatpush1.msra.mxu0 0.0
    %369 = vmatprep.subr.mxu0 0.0
    %370 = vmatpush1.msra.mxu0 0.0
    %371 = vmatprep.subr.mxu0 0.0
    %372 = vmatpush1.msra.mxu0 0.0
    %373 = vmatprep.subr.mxu0 0.0
    %374 = vmatpush1.msra.mxu0 0.0
    %375 = vmatprep.subr.mxu0 0.0
    %376 = vmatpush1.msra.mxu0 %v42
    %377 = vmatprep.subr.mxu0 0.0
    %378 = vmatpush1.msra.mxu0 %v41
    %379 = vmatprep.subr.mxu0 0.0
    %380 = vmatpush1.msra.mxu0 %v40
    %381 = vmatprep.subr.mxu0 0.0
    %382 = vmatpush1.msra.mxu0 %v39
    %383 = vmatprep.subr.mxu0 0.0
    %384 = vmatpush2.msra.mxu0 0.0
    %385 = vmatprep.subr.mxu0 0.0
    %386 = vmatpush2.msra.mxu0 0.0
    %387 = vmatprep.subr.mxu0 0.0
    %388 = vmatpush2.msra.mxu0 0.0
    %389 = vmatprep.subr.mxu0 0.0
    %390 = vmatpush2.msra.mxu0 0.0
    %391 = vmatprep.subr.mxu0 0.0
    %392 = vmatpush2.msra.mxu0 0.0
    %393 = vmatprep.subr.mxu0 0.0
    %394 = vmatpush2.msra.mxu0 0.0
    %395 = vmatprep.subr.mxu0 0.0
    %396 = vmatpush2.msra.mxu0 0.0
    %397 = vmatprep.subr.mxu0 0.0
    %398 = vmatpush2.msra.mxu0 0.0
    %399 = vmatprep.subr.mxu0 0.0
    %400 = vmatpush2.msra.mxu0 0.0
    %401 = vmatprep.subr.mxu0 0.0
    %402 = vmatpush2.msra.mxu0 0.0
    %403 = vmatprep.subr.mxu0 0.0
    %404 = vmatpush2.msra.mxu0 0.0
    %405 = vmatprep.subr.mxu0 0.0
    %406 = vmatpush2.msra.mxu0 0.0
    %407 = vmatprep.subr.mxu0 0.0
    %408 = vmatpush2.msra.mxu0 0.0
    %409 = vmatprep.subr.mxu0 0.0
    %410 = vmatpush2.msra.mxu0 0.0
    %411 = vmatprep.subr.mxu0 0.0
    %412 = vmatpush2.msra.mxu0 0.0
    %413 = vmatprep.subr.mxu0 0.0
    %414 = vmatpush2.msra.mxu0 0.0
    %415 = vmatprep.mubr.f32.mxu0 0.0
    %416 = vmatmul.mubr.f32.gmra.mxu0 %v304
    %v417 = vpop.f32.mrf.mxu0
    %v418 = vadd.f32 %v301, %v417
    %v419 = vpop.f32.mrf.mxu0
    %420 = vmatprep.mubr.f32.mxu0 0.0
    %421 = vmatmul.mubr.f32.gmra.mxu0 %v307
    %v422 = vpop.f32.mrf.mxu0
    %v423 = vadd.f32 %v301, %v422
    %v424 = vpop.f32.mrf.mxu0
    %425 = vmatprep.mubr.f32.mxu0 0.0
    %426 = vmatmul.mubr.f32.gmra.mxu0 %v310
    %v427 = vpop.f32.mrf.mxu0
    %v428 = vadd.f32 %v301, %v427
    %v429 = vpop.f32.mrf.mxu0
    %430 = vmatprep.mubr.f32.mxu0 0.0
    %431 = vmatmul.mubr.f32.gmra.mxu0 %v313
    %v432 = vpop.f32.mrf.mxu0
    %v433 = vadd.f32 %v301, %v432
    %v434 = vpop.f32.mrf.mxu0
    %435 = vmatprep.mubr.f32.mxu0 0.0
    %436 = vmatmul.mubr.f32.gmra.mxu0 %v316
    %v437 = vpop.f32.mrf.mxu0
    %v438 = vadd.f32 %v301, %v437
    %v439 = vpop.f32.mrf.mxu0
    %440 = vmatprep.mubr.f32.mxu0 0.0
    %441 = vmatmul.mubr.f32.gmra.mxu0 %v319
    %v442 = vpop.f32.mrf.mxu0
    %v443 = vadd.f32 %v301, %v442
    %v444 = vpop.f32.mrf.mxu0
    %445 = vmatprep.mubr.f32.mxu0 0.0
    %446 = vmatmul.mubr.f32.gmra.mxu0 %v322
    %v447 = vpop.f32.mrf.mxu0
    %v448 = vadd.f32 %v301, %v447
    %v449 = vpop.f32.mrf.mxu0
    %450 = vmatprep.mubr.f32.mxu0 0.0
    %451 = vmatmul.mubr.f32.gmra.mxu0 %v325
    %v452 = vpop.f32.mrf.mxu0
    %v453 = vadd.f32 %v301, %v452
    %v454 = vpop.f32.mrf.mxu0
    %455 = vmatprep.mubr.f32.mxu0 0.0
    %456 = vmatmul.mubr.f32.gmra.mxu0 %v328
    %v457 = vpop.f32.mrf.mxu0
    %v458 = vadd.f32 %v301, %v457
    %v459 = vpop.f32.mrf.mxu0
    %460 = vmatprep.mubr.f32.mxu0 0.0
    %461 = vmatmul.mubr.f32.gmra.mxu0 %v331
    %v462 = vpop.f32.mrf.mxu0
    %v463 = vadd.f32 %v301, %v462
    %v464 = vpop.f32.mrf.mxu0
    %465 = vmatprep.mubr.f32.mxu0 0.0
    %466 = vmatmul.mubr.f32.gmra.mxu0 %v334
    %v467 = vpop.f32.mrf.mxu0
    %v468 = vadd.f32 %v301, %v467
    %v469 = vpop.f32.mrf.mxu0
    %470 = vmatprep.mubr.f32.mxu0 0.0
    %471 = vmatmul.mubr.f32.gmra.mxu0 %v337
    %v472 = vpop.f32.mrf.mxu0
    %v473 = vadd.f32 %v301, %v472
    %v474 = vpop.f32.mrf.mxu0
    %475 = vmatprep.mubr.f32.mxu0 0.0
    %476 = vmatmul.mubr.f32.gmra.mxu0 %v340
    %v477 = vpop.f32.mrf.mxu0
    %v478 = vadd.f32 %v301, %v477
    %v479 = vpop.f32.mrf.mxu0
    %480 = vmatprep.mubr.f32.mxu0 0.0
    %481 = vmatmul.mubr.f32.gmra.mxu0 %v343
    %v482 = vpop.f32.mrf.mxu0
    %v483 = vadd.f32 %v301, %v482
    %v484 = vpop.f32.mrf.mxu0
    %485 = vmatprep.mubr.f32.mxu0 0.0
    %486 = vmatmul.mubr.f32.gmra.mxu0 %v346
    %v487 = vpop.f32.mrf.mxu0
    %v488 = vadd.f32 %v301, %v487
    %v489 = vpop.f32.mrf.mxu0
    %490 = vmatprep.mubr.f32.mxu0 0.0
    %491 = vmatmul.mubr.f32.gmra.mxu0 %v349
    %v492 = vpop.f32.mrf.mxu0
    %v493 = vadd.f32 %v301, %v492
    %v494 = vpop.f32.mrf.mxu0
    %495 = vdwg.mxu0
    %496 = vxpose.xlu0.b32.start [1/16] %v418, 128
    %497 = vxpose.xlu0.b32.cont [2/16] %v423, 128
    %498 = vxpose.xlu0.b32.cont [3/16] %v428, 128
    %499 = vxpose.xlu0.b32.cont [4/16] %v433, 128
    %500 = vxpose.xlu0.b32.cont [5/16] %v438, 128
    %501 = vxpose.xlu0.b32.cont [6/16] %v443, 128
    %502 = vxpose.xlu0.b32.cont [7/16] %v448, 128
    %503 = vxpose.xlu0.b32.cont [8/16] %v453, 128
    %504 = vxpose.xlu0.b32.cont [9/16] %v458, 128
    %505 = vxpose.xlu0.b32.cont [10/16] %v463, 128
    %506 = vxpose.xlu0.b32.cont [11/16] %v468, 128
    %507 = vxpose.xlu0.b32.cont [12/16] %v473, 128
    %508 = vxpose.xlu0.b32.cont [13/16] %v478, 128
    %509 = vxpose.xlu0.b32.cont [14/16] %v483, 128
    %510 = vxpose.xlu0.b32.cont [15/16] %v488, 128
    %511 = vxpose.xlu0.b32.end [16/16] %v493, 128
    %v512 = vpop.trf.xlu0
    %v513 = vpop.trf.xlu0
    %v514 = vpop.trf.xlu0
    %v515 = vpop.trf.xlu0
    %v516 = vpop.trf.xlu0
    %v517 = vpop.trf.xlu0
    %v518 = vpop.trf.xlu0
    %v519 = vpop.trf.xlu0
    %v520 = vpop.trf.xlu0
    %v521 = vpop.trf.xlu0
    %v522 = vpop.trf.xlu0
    %v523 = vpop.trf.xlu0
    %v524 = vpop.trf.xlu0
    %v525 = vpop.trf.xlu0
    %v526 = vpop.trf.xlu0
    %v527 = vpop.trf.xlu0
    %528 = vst [vmem:[#allocation2] sm:$0xff] %v512
    %529 = vst [vmem:[#allocation2 + $0x8] sm:$0xff] %v513
    // Predicated region
    $region22: #{tpu_custom_call.1} parent=1 // pred_check
      _
    $region23: #{tpu_custom_call.1} parent=1 // pred_check_branch
      %531 = sbr.rel (0) target = $region25
    $region24: #{tpu_custom_call.1} parent=1 // pred_region
      %s533 = ssub.s32 256, 256
      %534 = vsyncadd [#allocation3], %s533
      %s535 = sshll.u32 [#allocation2], 4
      %s536 = int_to_ptr.vmem [resolvable:$true] %s535
      %541 = dma.vmem_to_hbm [thread:$0]  %s536, 256, %s5, [#allocation3], 128, 128, 8
    $region25: #{tpu_custom_call.1} parent=1 // pred_fallthru
      _
    // Predicated region
    $region26: #{tpu_custom_call.1} parent=1 // pred_check
      _
    $region27: #{tpu_custom_call.1} parent=1 // pred_check_branch
      %543 = sbr.rel (0) target = $region29
    $region28: #{tpu_custom_call.1} parent=1 // pred_region
      %544 = dma.done [#allocation3], 256
    $region29: #{tpu_custom_call.1} parent=1 // pred_fallthru
      _
    %545 = vsyncpa [#allocation3], 1

</llo_original>
